<compile_context>
chip_gen: v7x
topology: tpu7x:2x2x1
jax: 0.10.0
libtpu: 0.0.40
codegen_flags: <defaults>
</compile_context>

<pallas_src>
import functools

import jax
import jax.numpy as jnp
from jax.experimental import pallas as pl
from jax.experimental.pallas import tpu as pltpu


def _round_up(x, m):
    return ((x + m - 1) // m) * m


def _mlp_kernel(x_ref, w_ref, p_ref, o_ref, h_ref, *, n_real: int, eps: float):
    """One grid step == one [Linear -> BatchNorm1d (-> ReLU)] layer.

    x_ref : (N_pad, Kp0)       f32   input activations (resident; used at l==0)
    w_ref : (1, D_pad, D_pad)  bf16  this layer's zero-padded weight tile
    p_ref : (1, 8, D_pad)      f32   packed params: sublane0=gamma, sublane1=beta
    o_ref : (N_pad, O_pad)     f32   final output (resident; written at last step)
    h_ref : (N_pad, D_pad)     bf16  carried activations (VMEM scratch)

    BatchNorm1d uses training-mode (biased) batch statistics over the first
    `n_real` rows, matching a fresh torch module in .train().
    """
    l = pl.program_id(0)
    last = pl.num_programs(0) - 1
    n_pad, d_pad = h_ref.shape
    kp0 = x_ref.shape[1]
    out_cols = o_ref.shape[1]
    masked = n_pad != n_real          # static Python bool
    inv_n = 1.0 / float(n_real)

    # Initialize the carried activation scratch from the (narrower) input block.
    @pl.when(l == 0)
    def _():
        if kp0 == d_pad:
            h_ref[...] = x_ref[...].astype(h_ref.dtype)
        else:
            h_ref[...] = jnp.zeros(h_ref.shape, h_ref.dtype)
            h_ref[:, :kp0] = x_ref[...].astype(h_ref.dtype)

    # Linear: bf16 MXU operands, f32 accumulation.  The Linear bias is omitted:
    # the batch-mean subtraction below cancels any per-feature additive
    # constant exactly, so the forward output is unchanged.
    y = jnp.dot(h_ref[...], w_ref[0], preferred_element_type=jnp.float32)

    # Single-pass batch statistics (biased variance) over the real rows.
    # Padded rows of h are kept exactly zero, so unmasked sums == masked sums.
    s1 = jnp.sum(y, axis=0, keepdims=True)
    s2 = jnp.sum(y * y, axis=0, keepdims=True)
    mean = s1 * inv_n
    var = jnp.maximum(s2 * inv_n - mean * mean, 0.0)   # clamp fp cancellation

    gamma = p_ref[0, 0:1, :]                            # (1, D_pad)
    beta = p_ref[0, 1:2, :]                             # (1, D_pad)
    scale = gamma * jax.lax.rsqrt(var + eps)            # gamma folded into scale
    y = (y - mean) * scale + beta

    # Hidden layers: ReLU, re-zero padded rows once, carry to next grid step.
    @pl.when(l < last)
    def _():
        z = jnp.maximum(y, 0.0)
        if masked:
            row_mask = jax.lax.broadcasted_iota(jnp.int32, (n_pad, 1), 0) < n_real
            z = jnp.where(row_mask, z, 0.0)
        h_ref[...] = z.astype(h_ref.dtype)

    # Final layer: no ReLU; store only the lane-dense output columns.
    @pl.when(l == last)
    def _():
        o_ref[...] = y[:, :out_cols].astype(o_ref.dtype)


class MLPPallas:
    """JAX/Pallas port of the PyTorch MLP (training-mode BatchNorm1d)."""

    def __init__(self, input_units, hidden_units, output_units, hidden_layers, key):
        dims = []
        u = input_units
        for _ in range(hidden_layers):
            dims.append((u, hidden_units))
            u = hidden_units
        dims.append((u, output_units))
        L = len(dims)

        self.output_units = output_units
        self.num_layers = L
        self.kp0 = _round_up(input_units, 128)              # input lane pad
        self.op = _round_up(output_units, 128)              # output lane pad
        # Shared pad for the streamed weight slab; all feature dims here are
        # <= 128 so this already equals the per-layer minimum padding.
        self.d_pad = _round_up(max(input_units, hidden_units, output_units), 128)
        D = self.d_pad

        w_slab = jnp.zeros((L, D, D), jnp.float32)
        p_slab = jnp.zeros((L, 8, D), jnp.float32)          # sublane0=gamma, 1=beta

        self.ref_params = []   # unpadded params (incl. bias) for the reference
        for li, (d_in, d_out) in enumerate(dims):
            key, k_w, k_b, k_g, k_bt = jax.random.split(key, 5)
            bound = 1.0 / (d_in ** 0.5)
            w = jax.random.uniform(k_w, (d_in, d_out), jnp.float32, -bound, bound)
            b = jax.random.uniform(k_b, (d_out,), jnp.float32, -bound, bound)
            gamma = 1.0 + 0.1 * jax.random.normal(k_g, (d_out,), jnp.float32)
            beta = 0.1 * jax.random.normal(k_bt, (d_out,), jnp.float32)
            apply_relu = li < L - 1
            self.ref_params.append((w, b, gamma, beta, apply_relu))

            w_slab = w_slab.at[li, :d_in, :d_out].set(w)
            p_slab = p_slab.at[li, 0, :d_out].set(gamma)
            p_slab = p_slab.at[li, 1, :d_out].set(beta)

        self.w_slab = w_slab.astype(jnp.bfloat16)   # bf16 MXU operands, half the DMA
        self.p_slab = p_slab

    def __call__(self, x):
        batch_shape = x.shape[:-1]
        d_in = x.shape[-1]
        h = x.reshape(-1, d_in).astype(jnp.float32)
        n_real = h.shape[0]
        n_pad = _round_up(max(n_real, 16), 16)       # 16-row bf16 sublane packing
        D, Kp0, Op, L = self.d_pad, self.kp0, self.op, self.num_layers

        # Pad only rows (to 16) and the input feature dim (to 128 lanes).
        x_pad = jnp.pad(h, ((0, n_pad - n_real), (0, Kp0 - d_in)))

        # VMEM budget: double-buffered weight/param tiles + resident input/output
        # blocks + carried activation scratch (fits v7x's 64 MiB/TC with margin).
        ws = (2 * D * D * 2            # 2x bf16 weight tile (double buffered)
              + 2 * 8 * D * 4          # 2x f32 gamma/beta tile
              + n_pad * Kp0 * 4        # resident input block
              + n_pad * Op * 4         # resident output block
              + n_pad * D * 2)         # bf16 activation scratch
        vmem_limit = int(min(max(2 * ws, 16 << 20), 48 << 20))

        kernel = functools.partial(_mlp_kernel, n_real=n_real, eps=1e-5)
        out = pl.pallas_call(
            kernel,
            out_shape=jax.ShapeDtypeStruct((n_pad, Op), jnp.float32),
            grid_spec=pltpu.PrefetchScalarGridSpec(
                num_scalar_prefetch=0,
                grid=(L,),
                in_specs=[
                    pl.BlockSpec((n_pad, Kp0), lambda l: (0, 0)),   # x (resident)
                    pl.BlockSpec((1, D, D), lambda l: (l, 0, 0)),   # per-layer W
                    pl.BlockSpec((1, 8, D), lambda l: (l, 0, 0)),   # gamma/beta
                ],
                out_specs=pl.BlockSpec((n_pad, Op), lambda l: (0, 0)),
                scratch_shapes=[pltpu.VMEM((n_pad, D), jnp.bfloat16)],
            ),
            compiler_params=pltpu.CompilerParams(
                dimension_semantics=("arbitrary",),
                vmem_limit_bytes=vmem_limit),
        )(x_pad, self.w_slab, self.p_slab)

        out = out[:n_real, :self.output_units]
        return out.reshape(*batch_shape, self.output_units)

    # Pure-JAX reference (faithful to torch: keeps the Linear bias, two-pass
    # batch stats).  Used for verification only.
    def reference(self, x, *, bf16_matmul=True):
        batch_shape = x.shape[:-1]
        h = x.reshape(-1, x.shape[-1]).astype(jnp.float32)
        eps = 1e-5
        for (w, b, gamma, beta, apply_relu) in self.ref_params:
            if bf16_matmul:   # mirrors the kernel's bf16-operand / f32-acc matmul
                y = jnp.dot(h.astype(jnp.bfloat16), w.astype(jnp.bfloat16),
                            preferred_element_type=jnp.float32) + b[None, :]
            else:
                y = h @ w + b[None, :]
            mean = jnp.mean(y, axis=0, keepdims=True)
            centered = y - mean
            var = jnp.mean(centered * centered, axis=0, keepdims=True)
            y = centered * (gamma[None, :] * jax.lax.rsqrt(var + eps)) + beta[None, :]
            if apply_relu:
                y = jnp.maximum(y, 0.0)
            h = y
        return h.reshape(*batch_shape, -1)


if __name__ == "__main__":
    key = jax.random.PRNGKey(0)
    k_model, k_x = jax.random.split(key)

    input_units, hidden_units, output_units, hidden_layers = 32, 32, 16, 2
    model = MLPPallas(input_units, hidden_units, output_units, hidden_layers, k_model)

    # x: leading batch dims (2, 8) are flattened internally, features last.
    x = jax.random.normal(k_x, (2, 8, input_units), jnp.float32)

    out = jax.block_until_ready(model(x))
    assert out.shape == (2, 8, output_units), out.shape

    # Structural check (reference mirrors the bf16-operand matmul; bias and
    # two-pass stats differ only at fp-rounding level from the kernel).
    ref = model.reference(x, bf16_matmul=True)
    err = float(jnp.max(jnp.abs(out - ref)))
    assert jnp.allclose(out, ref, atol=2e-3, rtol=2e-3), err

    # Semantics sanity check against full-f32 math (bf16 MXU rounding only).
    ref_f32 = model.reference(x, bf16_matmul=False)
    assert float(jnp.max(jnp.abs(out - ref_f32))) < 1e-1

    print("KERNEL_OK")
</pallas_src>

<mosaic_0001>
module attributes {stable_mosaic.version = 11 : i64} {
  func.func @_mlp_kernel(%arg0: i32, %arg1: memref<16x128xf32, #tpu.memory_space<vmem>>, %arg2: memref<1x128x128xbf16, #tpu.memory_space<vmem>>, %arg3: memref<1x8x128xf32, #tpu.memory_space<vmem>>, %arg4: memref<16x128xf32, #tpu.memory_space<vmem>>, %arg5: memref<16x128xbf16, #tpu.memory_space<vmem>>) attributes {dimension_semantics = [#tpu.dimension_semantics<arbitrary>], iteration_bounds = array<i64: 3>, scalar_prefetch = 0 : i64, scratch_operands = 1 : i64, tpu.core_type = #tpu.core_type<tc>, window_params = [{pipeline_mode = #tpu.pipeline_mode<synchronous>, transform_indices = @transform_0, window_bounds = array<i64: 16, 128>}, {transform_indices = @transform_1, window_bounds = array<i64: 1, 128, 128>}, {transform_indices = @transform_2, window_bounds = array<i64: 1, 8, 128>}, {pipeline_mode = #tpu.pipeline_mode<synchronous>, transform_indices = @transform_3, window_bounds = array<i64: 16, 128>}]} {
    %c0_i32 = arith.constant 0 : i32
    %0 = arith.cmpi eq, %arg0, %c0_i32 : i32
    %1 = arith.extui %0 : i1 to i32
    %c0_i32_0 = arith.constant 0 : i32
    %2 = arith.cmpi ne, %1, %c0_i32_0 : i32
    scf.if %2 {
      %c0_19 = arith.constant 0 : index
      %c0_20 = arith.constant 0 : index
      %40 = vector.load %arg1[%c0_19, %c0_20] : memref<16x128xf32, #tpu.memory_space<vmem>>, vector<16x128xf32>
      %41 = arith.truncf %40 : vector<16x128xf32> to vector<16x128xbf16>
      %c0_21 = arith.constant 0 : index
      %c0_22 = arith.constant 0 : index
      %42 = vector.load %arg5[%c0_21, %c0_22] : memref<16x128xbf16, #tpu.memory_space<vmem>>, vector<16x128xbf16>
      tpu.vector_store %arg5[%c0_21, %c0_22], %41 {strides = array<i32>} : memref<16x128xbf16, #tpu.memory_space<vmem>>, vector<16x128xbf16>,
    } else {
    }
    %c0 = arith.constant 0 : index
    %c0_1 = arith.constant 0 : index
    %3 = vector.load %arg5[%c0, %c0_1] : memref<16x128xbf16, #tpu.memory_space<vmem>>, vector<16x128xbf16>
    %c0_2 = arith.constant 0 : index
    %c0_3 = arith.constant 0 : index
    %c0_4 = arith.constant 0 : index
    %4 = vector.load %arg2[%c0_2, %c0_3, %c0_4] : memref<1x128x128xbf16, #tpu.memory_space<vmem>>, vector<1x128x128xbf16>
    %5 = vector.shape_cast %4 : vector<1x128x128xbf16> to vector<128x128xbf16>
    %cst = arith.constant dense<0.000000e+00> : vector<16x128xf32>
    %6 = tpu.matmul %3, %5, %cst {dimension_numbers = #tpu.dot_dimension_numbers<[1], [0], [0], [1], [0, 0, 1, 1], [], []>} : vector<16x128xbf16>, vector<128x128xbf16>, vector<16x128xf32> -> vector<16x128xf32>
    %cst_5 = arith.constant dense<0.000000e+00> : vector<128xf32>
    %7 = vector.multi_reduction <add>, %6, %cst_5 [0] : vector<16x128xf32> to vector<128xf32>
    %8 = vector.shape_cast %7 : vector<128xf32> to vector<1x128xf32>
    %9 = arith.mulf %6, %6 : vector<16x128xf32>
    %cst_6 = arith.constant dense<0.000000e+00> : vector<128xf32>
    %10 = vector.multi_reduction <add>, %9, %cst_6 [0] : vector<16x128xf32> to vector<128xf32>
    %11 = vector.shape_cast %10 : vector<128xf32> to vector<1x128xf32>
    %cst_7 = arith.constant 6.250000e-02 : f32
    %12 = vector.broadcast %cst_7 : f32 to vector<1x128xf32>
    %13 = arith.mulf %8, %12 : vector<1x128xf32>
    %cst_8 = arith.constant 6.250000e-02 : f32
    %14 = vector.broadcast %cst_8 : f32 to vector<1x128xf32>
    %15 = arith.mulf %11, %14 : vector<1x128xf32>
    %16 = arith.mulf %13, %13 : vector<1x128xf32>
    %17 = arith.subf %15, %16 : vector<1x128xf32>
    %cst_9 = arith.constant 0.000000e+00 : f32
    %18 = vector.broadcast %cst_9 : f32 to vector<1x128xf32>
    %19 = arith.maximumf %17, %18 : vector<1x128xf32>
    %c0_10 = arith.constant 0 : index
    %c0_11 = arith.constant 0 : index
    %c0_12 = arith.constant 0 : index
    %20 = vector.load %arg3[%c0_10, %c0_11, %c0_12] : memref<1x8x128xf32, #tpu.memory_space<vmem>>, vector<1x1x128xf32>
    %21 = vector.shape_cast %20 : vector<1x1x128xf32> to vector<1x128xf32>
    %c0_13 = arith.constant 0 : index
    %c1 = arith.constant 1 : index
    %c0_14 = arith.constant 0 : index
    %22 = vector.load %arg3[%c0_13, %c1, %c0_14] : memref<1x8x128xf32, #tpu.memory_space<vmem>>, vector<1x1x128xf32>
    %23 = vector.shape_cast %22 : vector<1x1x128xf32> to vector<1x128xf32>
    %cst_15 = arith.constant 9.99999974E-6 : f32
    %24 = vector.broadcast %cst_15 : f32 to vector<1x128xf32>
    %25 = arith.addf %19, %24 : vector<1x128xf32>
    %26 = math.rsqrt %25 : vector<1x128xf32>
    %27 = arith.mulf %21, %26 : vector<1x128xf32>
    %28 = vector.broadcast %13 : vector<1x128xf32> to vector<16x128xf32>
    %29 = arith.subf %6, %28 : vector<16x128xf32>
    %30 = vector.broadcast %27 : vector<1x128xf32> to vector<16x128xf32>
    %31 = arith.mulf %29, %30 : vector<16x128xf32>
    %32 = vector.broadcast %23 : vector<1x128xf32> to vector<16x128xf32>
    %33 = arith.addf %31, %32 : vector<16x128xf32>
    %c2_i32 = arith.constant 2 : i32
    %34 = arith.cmpi slt, %arg0, %c2_i32 : i32
    %35 = arith.extui %34 : i1 to i32
    %c0_i32_16 = arith.constant 0 : i32
    %36 = arith.cmpi ne, %35, %c0_i32_16 : i32
    scf.if %36 {
      %cst_19 = arith.constant 0.000000e+00 : f32
      %40 = vector.broadcast %cst_19 : f32 to vector<16x128xf32>
      %41 = arith.maximumf %33, %40 : vector<16x128xf32>
      %42 = arith.truncf %41 : vector<16x128xf32> to vector<16x128xbf16>
      %c0_20 = arith.constant 0 : index
      %c0_21 = arith.constant 0 : index
      %43 = vector.load %arg5[%c0_20, %c0_21] : memref<16x128xbf16, #tpu.memory_space<vmem>>, vector<16x128xbf16>
      tpu.vector_store %arg5[%c0_20, %c0_21], %42 {strides = array<i32>} : memref<16x128xbf16, #tpu.memory_space<vmem>>, vector<16x128xbf16>,
    } else {
    }
    %c2_i32_17 = arith.constant 2 : i32
    %37 = arith.cmpi eq, %arg0, %c2_i32_17 : i32
    %38 = arith.extui %37 : i1 to i32
    %c0_i32_18 = arith.constant 0 : i32
    %39 = arith.cmpi ne, %38, %c0_i32_18 : i32
    scf.if %39 {
      %c0_19 = arith.constant 0 : index
      %c0_20 = arith.constant 0 : index
      %40 = vector.load %arg4[%c0_19, %c0_20] : memref<16x128xf32, #tpu.memory_space<vmem>>, vector<16x128xf32>
      tpu.vector_store %arg4[%c0_19, %c0_20], %33 {strides = array<i32>} : memref<16x128xf32, #tpu.memory_space<vmem>>, vector<16x128xf32>,
    } else {
    }
    return
  }
  func.func @transform_0(%arg0: i32) -> (i32, i32) {
    %c0_i32 = arith.constant 0 : i32
    %c0_i32_0 = arith.constant 0 : i32
    %c0_i32_1 = arith.constant 0 : i32
    return %c0_i32, %c0_i32_0 : i32, i32
  }
  func.func @transform_1(%arg0: i32) -> (i32, i32, i32) {
    %c0_i32 = arith.constant 0 : i32
    %c0_i32_0 = arith.constant 0 : i32
    %c0_i32_1 = arith.constant 0 : i32
    return %arg0, %c0_i32, %c0_i32_0 : i32, i32, i32
  }
  func.func @transform_2(%arg0: i32) -> (i32, i32, i32) {
    %c0_i32 = arith.constant 0 : i32
    %c0_i32_0 = arith.constant 0 : i32
    %c0_i32_1 = arith.constant 0 : i32
    return %arg0, %c0_i32, %c0_i32_0 : i32, i32, i32
  }
  func.func @transform_3(%arg0: i32) -> (i32, i32) {
    %c0_i32 = arith.constant 0 : i32
    %c0_i32_0 = arith.constant 0 : i32
    %c0_i32_1 = arith.constant 0 : i32
    return %c0_i32, %c0_i32_0 : i32, i32
  }
}

</mosaic_0001>

<llo_original>
// kernel: tpu_custom_call.1
$region0: #{tpu_custom_call.1}
  #allocation0 [shape = 'u32[]', space=smem, size = 0x4, offset = 0x4, fixed_abs, tag = 'smem constant byte address 0x4 - core index']
  #allocation1 [shape = 'u32[144,128]{1,0:T(1,128)}', space=vmem, size = 0x12000, scoped, tag = 'internal scratch']
  #allocation2 [shape = 'bf16[16,128]{1,0:T(16,128)(2,1)}', space=vmem, size = 0x1000, scoped, tag = 'scratch operand']
  %s0 = inlined_call_operand.hbm [shape: f32[16,128], index: 0, kind: input, shape index: {}]
  %s1 = inlined_call_operand.hbm [shape: bf16[3,128,128], index: 1, kind: input, shape index: {}]
  %s2 = inlined_call_operand.hbm [shape: f32[3,8,128], index: 2, kind: input, shape index: {}]
  %s3 = inlined_call_operand.hbm [shape: f32[16,128], index: 3, kind: output, shape index: {}]
  %s4 = sld [smem:[#allocation0]]
  $region69: #{tpu_custom_call.1} parent=0
    _
  %s6 = ssub.s32 1, %s4
  %s7 = scalar_select 0, %s6, %s4
  $region1: #{tpu_custom_call.1} parent=0
    #allocation3 [shape = 'u8[8192]{0}', space=vmem, size = 0x2000, scoped, tag = 'input window, operand 0, single buffered']
    #allocation4 [shape = 's32[2]{0}', space=sflag, size = 0x8, scoped, tag = 'scoped memory for tpu_custom_call.1']
    #allocation5 [shape = 's32[2]{0}', space=sflag, size = 0x8, scoped, tag = 'scoped memory for tpu_custom_call.1']
    #allocation6 [shape = 'u8[65536]{0}', space=vmem, size = 0x10000, scoped, tag = 'input window, operand 1']
    #allocation7 [shape = 's32[2]{0}', space=sflag, size = 0x8, scoped, tag = 'scoped memory for tpu_custom_call.1']
    #allocation8 [shape = 'u8[8192]{0}', space=vmem, size = 0x2000, scoped, tag = 'input window, operand 2']
    #allocation9 [shape = 'u8[8192]{0}', space=vmem, size = 0x2000, scoped, tag = 'output window, operand 0, single buffered']
    %8 = vsyncpa [#allocation4], 0
    %9 = vsyncpa [#allocation7], 0
    %s10 = scalar_lea.sflag [#allocation7], 1
    %11 = vsyncpa %s10, 0
    %12 = vsyncpa [#allocation5], 0
    loop: start=0, step=1, limit=5
    $region2: #{tpu_custom_call.1} parent=1 // loop_pre_header
      _
    $region3: #{tpu_custom_call.1} parent=1 // loop_header
      %s14 = sphi 0, %s18
      %p15 = scmp.ge.s32.totalorder %s14, 5
      %s22 = sphi 0, %s22
      %s24 = sphi 0, %s22
      %s25 = sphi 0, %s24
      %s39 = sphi 0, %s25
      %s45 = sphi 0, %s47
      %s48 = sphi 0, %s45
      %s49 = sphi 0, %s48
      %s65 = sphi 0, %s49
      %s71 = sphi 0, %s73
      %s74 = sphi 0, %s71
      %s75 = sphi 0, %s74
      %s91 = sphi 0, %s75
      %s95 = sphi 0, %s95
      %s97 = sphi 0, %s95
      %s98 = sphi 0, %s97
      %s112 = sphi 0, %s98
    $region4: #{tpu_custom_call.1} parent=1 // loop_header_branch
      %17 = sbr.rel (%p15) target = $region8
    $region5: #{tpu_custom_call.1} parent=1 // loop_body
      %s19 = ssub.s32 %s14, 1
      %s20 = ssub.s32 %s14, 2
      %s21 = sadd.s32 %s14, 1
      %s23 = sadd.s32 %s22, 1
      %p26 = scmp.eq.s32.totalorder %s14, 2
      %p27 = scmp.ne.s32.totalorder %s22, %s24
      %p28 = scmp.eq.s32.totalorder %s14, 0
      %p29 = por %p27, %p28
      %p30 = scmp.ne.s32.totalorder %s22, %s24
      %p31 = scmp.eq.s32.totalorder %s19, 2
      %p32 = por %p30, %p31
      %p33 = scmp.ne.s32.totalorder %s24, %s25
      %p34 = scmp.eq.s32.totalorder %s19, 0
      %p35 = por %p33, %p34
      %p36 = scmp.ne.s32.totalorder %s24, %s25
      %p37 = scmp.eq.s32.totalorder %s20, 2
      %p38 = por %p36, %p37
      %p40 = scmp.ne.s32.totalorder %s25, %s39
      %p41 = scmp.eq.s32.totalorder %s20, 0
      %p42 = por %p40, %p41
      %s43 = ssub.s32 %s14, %s21
      %p44 = scmp.eq.s32.totalorder %s43, 0
      %s46 = sadd.s32 %s45, 1
      %s47 = scalar_select %p44, %s45, %s46
      %p50 = pneg %p44
      %p51 = scmp.eq.s32.totalorder %s14, 2
      %p52 = por %p50, %p51
      %p53 = scmp.ne.s32.totalorder %s45, %s48
      %p54 = scmp.eq.s32.totalorder %s14, 0
      %p55 = por %p53, %p54
      %p56 = scmp.ne.s32.totalorder %s45, %s48
      %p57 = scmp.eq.s32.totalorder %s19, 2
      %p58 = por %p56, %p57
      %p59 = scmp.ne.s32.totalorder %s48, %s49
      %p60 = scmp.eq.s32.totalorder %s19, 0
      %p61 = por %p59, %p60
      %p62 = scmp.ne.s32.totalorder %s48, %s49
      %p63 = scmp.eq.s32.totalorder %s20, 2
      %p64 = por %p62, %p63
      %p66 = scmp.ne.s32.totalorder %s49, %s65
      %p67 = scmp.eq.s32.totalorder %s20, 0
      %p68 = por %p66, %p67
      %s69 = ssub.s32 %s14, %s21
      %p70 = scmp.eq.s32.totalorder %s69, 0
      %s72 = sadd.s32 %s71, 1
      %s73 = scalar_select %p70, %s71, %s72
      %p76 = pneg %p70
      %p77 = scmp.eq.s32.totalorder %s14, 2
      %p78 = por %p76, %p77
      %p79 = scmp.ne.s32.totalorder %s71, %s74
      %p80 = scmp.eq.s32.totalorder %s14, 0
      %p81 = por %p79, %p80
      %p82 = scmp.ne.s32.totalorder %s71, %s74
      %p83 = scmp.eq.s32.totalorder %s19, 2
      %p84 = por %p82, %p83
      %p85 = scmp.ne.s32.totalorder %s74, %s75
      %p86 = scmp.eq.s32.totalorder %s19, 0
      %p87 = por %p85, %p86
      %p88 = scmp.ne.s32.totalorder %s74, %s75
      %p89 = scmp.eq.s32.totalorder %s20, 2
      %p90 = por %p88, %p89
      %p92 = scmp.ne.s32.totalorder %s75, %s91
      %p93 = scmp.eq.s32.totalorder %s20, 0
      %p94 = por %p92, %p93
      %s96 = sadd.s32 %s95, 1
      %p99 = scmp.eq.s32.totalorder %s14, 2
      %p100 = scmp.ne.s32.totalorder %s95, %s97
      %p101 = scmp.eq.s32.totalorder %s14, 0
      %p102 = por %p100, %p101
      %p103 = scmp.ne.s32.totalorder %s95, %s97
      %p104 = scmp.eq.s32.totalorder %s19, 2
      %p105 = por %p103, %p104
      %p106 = scmp.ne.s32.totalorder %s97, %s98
      %p107 = scmp.eq.s32.totalorder %s19, 0
      %p108 = por %p106, %p107
      %p109 = scmp.ne.s32.totalorder %s97, %s98
      %p110 = scmp.eq.s32.totalorder %s20, 2
      %p111 = por %p109, %p110
      %p113 = scmp.ne.s32.totalorder %s98, %s112
      %p114 = scmp.eq.s32.totalorder %s20, 0
      %p115 = por %p113, %p114
      %p116 = scmp.le.s32.totalorder 1, %s14
      %p117 = scmp.lt.s32.totalorder %s14, 4
      %p118 = pnand %p116, %p117
      %p119 = pneg %p118
      // Predicated region
      $region9: #{tpu_custom_call.1} parent=5 // pred_check
        _
      $region10: #{tpu_custom_call.1} parent=5 // pred_check_branch
        %121 = sbr.rel (%p118) target = $region12
      $region11: #{tpu_custom_call.1} parent=5 // pred_region
        %s122 = ssub.s32 %s14, 1
        // Predicated region
        $region13: #{tpu_custom_call.1} parent=11 // pred_check
          %p123 = pneg %p35
        $region14: #{tpu_custom_call.1} parent=11 // pred_check_branch
          %125 = sbr.rel (%p123) target = $region16
        $region15: #{tpu_custom_call.1} parent=11 // pred_region
          %s127 = ssub.s32 256, 256
          %128 = vsyncadd [#allocation4], %s127
          %s129 = sshll.u32 [#allocation3], 4
          %s130 = int_to_ptr.vmem [resolvable:$true] %s129
          %135 = dma.hbm_to_vmem [thread:$0]  %s0, 256, %s130, [#allocation4], 128, 128, 8
        $region16: #{tpu_custom_call.1} parent=11 // pred_fallthru
          _
      $region12: #{tpu_custom_call.1} parent=5 // pred_fallthru
        _
      %p136 = scmp.lt.s32.totalorder %s14, 3
      // Predicated region
      $region17: #{tpu_custom_call.1} parent=5 // pred_check
        %p137 = pneg %p136
      $region18: #{tpu_custom_call.1} parent=5 // pred_check_branch
        %139 = sbr.rel (%p137) target = $region20
      $region19: #{tpu_custom_call.1} parent=5 // pred_region
        // Predicated region
        $region21: #{tpu_custom_call.1} parent=19 // pred_check
          %p140 = pneg %p55
        $region22: #{tpu_custom_call.1} parent=19 // pred_check_branch
          %142 = sbr.rel (%p140) target = $region24
        $region23: #{tpu_custom_call.1} parent=19 // pred_region
          %s143 = sand.u32 %s14, 1
          %s144 = scalar_lea.sflag [#allocation7], %s143
          %s145 = sand.u32 %s45, 1
          %s146 = smul.addr %s145, 64
          %s147 = scalar_lea.vmem [#allocation6], %s146
          %s149 = ssub.s32 1024, 1024
          %150 = vsyncadd %s144, %s149
          %s151 = smul.addr %s14, 16
          %s152 = smul.addr %s151, 64
          %s153 = scalar_lea.hbm %s1, %s152
          %s154 = sshll.u32 %s147, 4
          %s155 = int_to_ptr.vmem [resolvable:$true] %s154
          %160 = dma.hbm_to_vmem [thread:$0]  %s153, 1024, %s155, %s144, 64, 64, 4
        $region24: #{tpu_custom_call.1} parent=19 // pred_fallthru
          _
        // Predicated region
        $region25: #{tpu_custom_call.1} parent=19 // pred_check
          %p161 = pneg %p81
        $region26: #{tpu_custom_call.1} parent=19 // pred_check_branch
          %163 = sbr.rel (%p161) target = $region28
        $region27: #{tpu_custom_call.1} parent=19 // pred_region
          %s164 = sand.u32 %s14, 1
          %s165 = scalar_lea.sflag [#allocation7], %s164
          %s166 = sand.u32 %s71, 1
          %s167 = smul.addr %s166, 8
          %s168 = scalar_lea.vmem [#allocation8], %s167
          %s170 = ssub.s32 128, 128
          %171 = vsyncadd %s165, %s170
          %s172 = smul.addr %s14, 128
          %s173 = scalar_lea.hbm %s2, %s172
          %s175 = sshll.u32 %s168, 4
          %s176 = int_to_ptr.vmem [resolvable:$true] %s175
          %178 = dma.hbm_to_vmem [thread:$0]  %s173, 128, %s176, %s165
        $region28: #{tpu_custom_call.1} parent=19 // pred_fallthru
          _
      $region20: #{tpu_custom_call.1} parent=5 // pred_fallthru
        _
      %p179 = scmp.le.s32.totalorder 1, %s14
      %p180 = scmp.lt.s32.totalorder %s14, 4
      %p181 = pnand %p179, %p180
      %p182 = pneg %p181
      // Predicated region
      $region29: #{tpu_custom_call.1} parent=5 // pred_check
        _
      $region30: #{tpu_custom_call.1} parent=5 // pred_check_branch
        %184 = sbr.rel (%p181) target = $region32
      $region31: #{tpu_custom_call.1} parent=5 // pred_region
        %s185 = ssub.s32 %s14, 1
        // Predicated region
        $region33: #{tpu_custom_call.1} parent=31 // pred_check
          %p186 = pneg %p35
        $region34: #{tpu_custom_call.1} parent=31 // pred_check_branch
          %188 = sbr.rel (%p186) target = $region36
        $region35: #{tpu_custom_call.1} parent=31 // pred_region
          %189 = dma.done [#allocation4], 256
        $region36: #{tpu_custom_call.1} parent=31 // pred_fallthru
          _
        %s190 = sand.u32 %s19, 1
        %s191 = scalar_lea.sflag [#allocation7], %s190
        %s192 = sand.u32 %s48, 1
        %s193 = smul.addr %s192, 64
        %s194 = scalar_lea.vmem [#allocation6], %s193
        // Predicated region
        $region37: #{tpu_custom_call.1} parent=31 // pred_check
          %p195 = pneg %p61
        $region38: #{tpu_custom_call.1} parent=31 // pred_check_branch
          %197 = sbr.rel (%p195) target = $region40
        $region39: #{tpu_custom_call.1} parent=31 // pred_region
          %198 = dma.done %s191, 1024
        $region40: #{tpu_custom_call.1} parent=31 // pred_fallthru
          _
        %s199 = sand.u32 %s19, 1
        %s200 = scalar_lea.sflag [#allocation7], %s199
        %s201 = sand.u32 %s74, 1
        %s202 = smul.addr %s201, 8
        %s203 = scalar_lea.vmem [#allocation8], %s202
        // Predicated region
        $region41: #{tpu_custom_call.1} parent=31 // pred_check
          %p204 = pneg %p87
        $region42: #{tpu_custom_call.1} parent=31 // pred_check_branch
          %206 = sbr.rel (%p204) target = $region44
        $region43: #{tpu_custom_call.1} parent=31 // pred_region
          %207 = dma.done %s200, 128
        $region44: #{tpu_custom_call.1} parent=31 // pred_fallthru
          _
        %p208 = pneg %p35
        %p209 = pneg %p32
        %s210 = sand.u32 %s19, 1
        %s211 = scalar_lea.sflag [#allocation7], %s210
        %s212 = sand.u32 %s48, 1
        %s213 = smul.addr %s212, 64
        %s214 = scalar_lea.vmem [#allocation6], %s213
        %p215 = pneg %p61
        %p216 = pneg %p58
        %s217 = sand.u32 %s19, 1
        %s218 = scalar_lea.sflag [#allocation7], %s217
        %s219 = sand.u32 %s74, 1
        %s220 = smul.addr %s219, 8
        %s221 = scalar_lea.vmem [#allocation8], %s220
        %p222 = pneg %p87
        %p223 = pneg %p84
        %p224 = pneg %p108
        %p225 = pneg %p105
        %p227 = scmp.eq.s32.totalorder %s19, 0
        // Predicated region
        $region45: #{tpu_custom_call.1} parent=31 // pred_check
          %p228 = pneg %p227
        $region46: #{tpu_custom_call.1} parent=31 // pred_check_branch
          %230 = sbr.rel (%p228) target = $region48
        $region47: #{tpu_custom_call.1} parent=31 // pred_region
          %v231 = vld [vmem:[#allocation3] sm:$0xff]
          %v232 = vld [vmem:[#allocation3 + $0x8] sm:$0xff]
          %v233 = vpack.c.bf16 %v232, %v231
          %234 = vst [vmem:[#allocation2] sm:$0xff] %v233
        $region48: #{tpu_custom_call.1} parent=31 // pred_fallthru
          _
        %v235 = vld [vmem:[#allocation2] sm:$0xff]
        %v236 = vld [vmem:[%s194] sm:$0xf]
        %v237 = vld [vmem:[%s194 + $0x4] sm:$0xf]
        %v238 = vld [vmem:[%s194 + $0x8] sm:$0xf]
        %v239 = vld [vmem:[%s194 + $0xc] sm:$0xf]
        %v240 = vld [vmem:[%s194 + $0x10] sm:$0xf]
        %v241 = vld [vmem:[%s194 + $0x14] sm:$0xf]
        %v242 = vld [vmem:[%s194 + $0x18] sm:$0xf]
        %v243 = vld [vmem:[%s194 + $0x1c] sm:$0xf]
        %v244 = vld [vmem:[%s194 + $0x20] sm:$0xf]
        %v245 = vld [vmem:[%s194 + $0x24] sm:$0xf]
        %v246 = vld [vmem:[%s194 + $0x28] sm:$0xf]
        %v247 = vld [vmem:[%s194 + $0x2c] sm:$0xf]
        %v248 = vld [vmem:[%s194 + $0x30] sm:$0xf]
        %v249 = vld [vmem:[%s194 + $0x34] sm:$0xf]
        %v250 = vld [vmem:[%s194 + $0x38] sm:$0xf]
        %v251 = vld [vmem:[%s194 + $0x3c] sm:$0xf]
        %v268 = vunpack.c.l.b16 %v236
        %v269 = vunpack.c.l.b16 %v237
        %v270 = vunpack.c.l.b16 %v238
        %v271 = vunpack.c.l.b16 %v239
        %v272 = vunpack.c.l.b16 %v240
        %v273 = vunpack.c.l.b16 %v241
        %v274 = vunpack.c.l.b16 %v242
        %v275 = vunpack.c.l.b16 %v243
        %v276 = vunpack.c.l.b16 %v244
        %v277 = vunpack.c.l.b16 %v245
        %v278 = vunpack.c.l.b16 %v246
        %v279 = vunpack.c.l.b16 %v247
        %v280 = vunpack.c.l.b16 %v248
        %v281 = vunpack.c.l.b16 %v249
        %v282 = vunpack.c.l.b16 %v250
        %v283 = vunpack.c.l.b16 %v251
        %v284 = vpack.c.b16 %v269, %v268
        %v285 = vpack.c.b16 %v271, %v270
        %v286 = vpack.c.b16 %v273, %v272
        %v287 = vpack.c.b16 %v275, %v274
        %v288 = vpack.c.b16 %v277, %v276
        %v289 = vpack.c.b16 %v279, %v278
        %v290 = vpack.c.b16 %v281, %v280
        %v291 = vpack.c.b16 %v283, %v282
        %300 = vmatprep.subr.bf16.mxu0 0
        %301 = vmatpush1.bf16.msra.mxu0 %v284
        %302 = vmatprep.subr.bf16.mxu0 0
        %303 = vmatpush1.bf16.msra.mxu0 %v285
        %304 = vmatprep.subr.bf16.mxu0 0
        %305 = vmatpush1.bf16.msra.mxu0 %v286
        %306 = vmatprep.subr.bf16.mxu0 0
        %307 = vmatpush1.bf16.msra.mxu0 %v287
        %308 = vmatprep.subr.bf16.mxu0 0
        %309 = vmatpush1.bf16.msra.mxu0 %v288
        %310 = vmatprep.subr.bf16.mxu0 0
        %311 = vmatpush1.bf16.msra.mxu0 %v289
        %312 = vmatprep.subr.bf16.mxu0 0
        %313 = vmatpush1.bf16.msra.mxu0 %v290
        %314 = vmatprep.subr.bf16.mxu0 0
        %315 = vmatpush1.bf16.msra.mxu0 %v291
        %316 = vmatprep.subr.bf16.mxu0 0
        %317 = vmatpush1.bf16.msra.mxu0 0
        %318 = vmatprep.subr.bf16.mxu0 0
        %319 = vmatpush1.bf16.msra.mxu0 0
        %320 = vmatprep.subr.bf16.mxu0 0
        %321 = vmatpush1.bf16.msra.mxu0 0
        %322 = vmatprep.subr.bf16.mxu0 0
        %323 = vmatpush1.bf16.msra.mxu0 0
        %324 = vmatprep.subr.bf16.mxu0 0
        %325 = vmatpush1.bf16.msra.mxu0 0
        %326 = vmatprep.subr.bf16.mxu0 0
        %327 = vmatpush1.bf16.msra.mxu0 0
        %328 = vmatprep.subr.bf16.mxu0 0
        %329 = vmatpush1.bf16.msra.mxu0 0
        %330 = vmatprep.subr.bf16.mxu0 0
        %331 = vmatpush1.bf16.msra.mxu0 0
        %332 = vmatprep.mubr.bf16.mxu0 0
        %333 = vmatmul.mubr.bf16.gmra.mrb[0].mxu0 %v235
        %v334 = vpop.f32.mrb[0].mxu0
        %v335 = vadd.f32 0.0, %v334
        %v336 = vpop.f32.mrb[0].mxu0
        %v337 = vpop.f32.mrb[0].mxu0
        %v338 = vadd.f32 0.0, %v337
        %v339 = vpop.f32.mrb[0].mxu0
        %340 = vdwg.mxu0
        %v341 = vadd.f32 %v335, %v338
        %v342 = vrot.slane %v341, 4
        %v343 = vadd.f32 %v341, %v342
        %v344 = vrot.slane %v343, 2
        %v345 = vadd.f32 %v343, %v344
        %v346 = vrot.slane %v345, 1
        %v347 = vadd.f32 %v345, %v346
        %v348 = vmul.f32 %v335, %v335
        %v349 = vmul.f32 %v338, %v338
        %v350 = vadd.f32 %v348, %v349
        %v351 = vrot.slane %v350, 4
        %v352 = vadd.f32 %v350, %v351
        %v353 = vrot.slane %v352, 2
        %v354 = vadd.f32 %v352, %v353
        %v355 = vrot.slane %v354, 1
        %v356 = vadd.f32 %v354, %v355
        %v357 = vmul.f32 %v347, 0.0625
        %v358 = vmul.f32 %v356, 0.0625
        %v359 = vmul.f32 %v357, %v357
        %v360 = vsub.f32 %v358, %v359
        %v361 = vmax.f32 %v360, 0.0
        %v362 = vld [vmem:[%s203] sm:$0x1]
        %v363 = vld [vmem:[%s203 + $0x1] sm:$0x1]
        %v364 = vadd.f32 %v361, 1e-05
        %v365 = vrsqrt.pop %v364
        %v366 = vmul.f32 %v362, %v365
        %v367 = vsub.f32 %v335, %v357
        %v368 = vsub.f32 %v338, %v357
        %v369 = vlaneseq
        %v370 = vshrl.u32 %v369, 7
        %v371 = vsub.s32 0, %v370
        %v372 = vrot.slane %v366, %v371
        %v373 = vmul.f32 %v367, %v372
        %v374 = vmul.f32 %v368, %v372
        %v375 = vlaneseq
        %v376 = vshrl.u32 %v375, 7
        %v377 = vsub.s32 0, %v376
        %v378 = vrot.slane %v363, %v377
        %v379 = vadd.f32 %v373, %v378
        %v380 = vadd.f32 %v374, %v378
        %p381 = scmp.lt.s32.totalorder %s19, 2
        // Predicated region
        $region49: #{tpu_custom_call.1} parent=31 // pred_check
          %p382 = pneg %p381
        $region50: #{tpu_custom_call.1} parent=31 // pred_check_branch
          %384 = sbr.rel (%p382) target = $region52
        $region51: #{tpu_custom_call.1} parent=31 // pred_region
          %v385 = vmax.f32 %v379, 0.0
          %v386 = vmax.f32 %v380, 0.0
          %v387 = vpack.c.bf16 %v386, %v385
          %388 = vst [vmem:[#allocation2] sm:$0xff] %v387
        $region52: #{tpu_custom_call.1} parent=31 // pred_fallthru
          _
        %p389 = scmp.eq.s32.totalorder %s19, 2
        // Predicated region
        $region53: #{tpu_custom_call.1} parent=31 // pred_check
          %p390 = pneg %p389
        $region54: #{tpu_custom_call.1} parent=31 // pred_check_branch
          %392 = sbr.rel (%p390) target = $region56
        $region55: #{tpu_custom_call.1} parent=31 // pred_region
          %393 = vst [vmem:[#allocation9] sm:$0xff] %v379
          %394 = vst [vmem:[#allocation9 + $0x8] sm:$0xff] %v380
        $region56: #{tpu_custom_call.1} parent=31 // pred_fallthru
          _
        // Predicated region
        $region57: #{tpu_custom_call.1} parent=31 // pred_check
          %p395 = pneg %p105
        $region58: #{tpu_custom_call.1} parent=31 // pred_check_branch
          %397 = sbr.rel (%p395) target = $region60
        $region59: #{tpu_custom_call.1} parent=31 // pred_region
          %s399 = ssub.s32 256, 256
          %400 = vsyncadd [#allocation5], %s399
          %s401 = sshll.u32 [#allocation9], 4
          %s402 = int_to_ptr.vmem [resolvable:$true] %s401
          %407 = dma.vmem_to_hbm [thread:$0]  %s402, 256, %s3, [#allocation5], 128, 128, 8
        $region60: #{tpu_custom_call.1} parent=31 // pred_fallthru
          _
        // Predicated region
        $region61: #{tpu_custom_call.1} parent=31 // pred_check
          %p408 = pneg %p105
        $region62: #{tpu_custom_call.1} parent=31 // pred_check_branch
          %410 = sbr.rel (%p408) target = $region64
        $region63: #{tpu_custom_call.1} parent=31 // pred_region
          %411 = dma.done [#allocation5], 256
        $region64: #{tpu_custom_call.1} parent=31 // pred_fallthru
          _
      $region32: #{tpu_custom_call.1} parent=5 // pred_fallthru
        _
      %p412 = scmp.le.s32.totalorder 2, %s14
      // Predicated region
      $region65: #{tpu_custom_call.1} parent=5 // pred_check
        %p413 = pneg %p412
      $region66: #{tpu_custom_call.1} parent=5 // pred_check_branch
        %415 = sbr.rel (%p413) target = $region68
      $region67: #{tpu_custom_call.1} parent=5 // pred_region
        %s416 = ssub.s32 %s14, 2
      $region68: #{tpu_custom_call.1} parent=5 // pred_fallthru
        _
    $region6: #{tpu_custom_call.1} parent=1 // loop_footer
      %s18 = sadd.s32 1, %s14
    $region7: #{tpu_custom_call.1} parent=1 // loop_footer_branch
      %13 = sbr.rel target = $region3
    $region8: #{tpu_custom_call.1} parent=1 // loop_exit
      _
    %417 = vsyncpa [#allocation4], 1
    %s418 = scalar_lea.sflag [#allocation4], 1
    %419 = vsyncpa %s418, 1
    %420 = vsyncpa [#allocation7], 1
    %s421 = scalar_lea.sflag [#allocation7], 1
    %422 = vsyncpa %s421, 1
    %423 = vsyncpa [#allocation5], 1
    %s424 = scalar_lea.sflag [#allocation5], 1
    %425 = vsyncpa %s424, 1

</llo_original>
